<compile_context>
chip_gen: v6e
topology: v6e:2x2x1
jax: 0.10.0
libtpu: 0.0.40
codegen_flags: <defaults>
</compile_context>

<pallas_src>
import functools
import math

import jax
import jax.numpy as jnp
from jax.experimental import pallas as pl
from jax.experimental.pallas import tpu as pltpu

_LANE = 128


def _round_up(x, m):
    return ((x + m - 1) // m) * m


def _pad_to(a, shape):
    """Zero-pad `a` on the high side of each dim up to `shape`."""
    pads = [(0, t - s) for s, t in zip(a.shape, shape)]
    if all(p == (0, 0) for p in pads):
        return a
    return jnp.pad(a, pads)


def _choose_batch_tile(b, s, t, target_rows=512):
    """Largest divisor Bt of B with Bt*max(S,T) <= target_rows (bigger tiles
    amortize per-step overhead), while keeping >=2 grid steps when B >= 2 so
    both TensorCores stay busy under megacore sharding."""
    best = 1
    for bt in range(1, b + 1):
        if b % bt == 0 and bt * max(s, t) <= target_rows:
            best = bt
    if b >= 2 and b // best < 2:
        for bt in range(best, 0, -1):
            if b % bt == 0 and b // bt >= 2:
                best = bt
                break
    return best


def _attention_kernel(x_ref, tgt_ref,
                      w_enc_ref, b_enc_ref,
                      w_dec_ref, b_dec_ref,
                      w_out_q_ref, w_out_c_ref, b_out_ref,
                      o_ref, *, bt, s_len, t_len, h_true):
    dp_in = x_ref.shape[-1]
    dp_tgt = tgt_ref.shape[-1]
    hp = w_enc_ref.shape[-1]
    vp = w_out_q_ref.shape[-1]

    # ---- encoder: fold batch into the matmul M dimension -------------------
    x2 = x_ref[...].reshape(bt * s_len, dp_in)                        # bf16
    enc2 = jnp.tanh(
        jnp.dot(x2, w_enc_ref[...], preferred_element_type=jnp.float32)
        + b_enc_ref[...])                                             # (Bt*S, Hp) f32

    # ---- decoder input projection (teacher forcing) -------------------------
    t2 = tgt_ref[...].reshape(bt * t_len, dp_tgt)                     # bf16
    q2 = jnp.tanh(
        jnp.dot(t2, w_dec_ref[...], preferred_element_type=jnp.float32)
        + b_dec_ref[...])                                             # (Bt*T, Hp) f32

    # bf16 copies for MXU operands (accumulate in f32)
    enc_b = enc2.reshape(bt, s_len, hp).astype(jnp.bfloat16)
    q_b = q2.reshape(bt, t_len, hp).astype(jnp.bfloat16)

    # ---- scaled dot-product attention (contract on H; no explicit .T) ------
    scale = 1.0 / math.sqrt(h_true)
    scores = jnp.einsum("btd,bsd->bts", q_b, enc_b,
                        preferred_element_type=jnp.float32) * scale   # (Bt, T, S)

    m = jnp.max(scores, axis=-1, keepdims=True)
    p = jnp.exp(scores - m)
    denom = jnp.sum(p, axis=-1, keepdims=True)
    attn = p * pl.reciprocal(denom, approx=True)                      # (Bt, T, S) f32

    ctx = jnp.einsum("bts,bsd->btd", attn.astype(jnp.bfloat16), enc_b,
                     preferred_element_type=jnp.float32)              # (Bt, T, Hp) f32

    # ---- output projection (lane-dense Vp; concat split into two matmuls) --
    ctx2 = ctx.reshape(bt * t_len, hp).astype(jnp.bfloat16)
    q2b = q_b.reshape(bt * t_len, hp)
    logits = (
        jnp.dot(q2b, w_out_q_ref[...], preferred_element_type=jnp.float32)
        + jnp.dot(ctx2, w_out_c_ref[...], preferred_element_type=jnp.float32)
        + b_out_ref[...])                                             # (Bt*T, Vp) f32

    o_ref[...] = logits.reshape(bt, t_len, vp)                        # f32, no cast


def attention_forward(x, target, params, teacher_force=1.0):
    """Forward pass of Attention(encoder, decoder).

    x:      [B, S, D_in]  encoder inputs
    target: [B, T, D_tgt] decoder inputs (teacher-forced)
    returns [B, T, V]     decoder output logits (float32)
    """
    # TODO(synk): autoregressive sampling path for teacher_force < 1.0 is not
    # implemented; with the module's default teacher_force=1.0 the decoder is
    # fully teacher-forced and hence parallel over time steps.
    del teacher_force

    (w_enc, b_enc, w_dec, b_dec, w_out_q, w_out_c, b_out) = params
    B, S, D_in = x.shape
    _, T, D_tgt = target.shape
    H = w_enc.shape[1]
    V = w_out_q.shape[1]

    # Pad feature dims to lane multiples (zero padding is exact: tanh(0)=0 and
    # zero weight columns / bias entries contribute nothing), cast matmul
    # operands to bf16. Biases stay f32 (added post-accumulation).
    dp_in, dp_tgt = _round_up(D_in, _LANE), _round_up(D_tgt, _LANE)
    hp, vp = _round_up(H, _LANE), _round_up(V, _LANE)

    xp = _pad_to(x, (B, S, dp_in)).astype(jnp.bfloat16)
    tp = _pad_to(target, (B, T, dp_tgt)).astype(jnp.bfloat16)
    w_enc_p = _pad_to(w_enc, (dp_in, hp)).astype(jnp.bfloat16)
    w_dec_p = _pad_to(w_dec, (dp_tgt, hp)).astype(jnp.bfloat16)
    w_out_q_p = _pad_to(w_out_q, (hp, vp)).astype(jnp.bfloat16)
    w_out_c_p = _pad_to(w_out_c, (hp, vp)).astype(jnp.bfloat16)
    b_enc_p = _pad_to(b_enc, (1, hp))
    b_dec_p = _pad_to(b_dec, (1, hp))
    b_out_p = _pad_to(b_out, (1, vp))

    bt = _choose_batch_tile(B, S, T)
    full = lambda b: (0, 0)

    kernel = functools.partial(_attention_kernel,
                               bt=bt, s_len=S, t_len=T, h_true=H)

    out = pl.pallas_call(
        kernel,
        out_shape=jax.ShapeDtypeStruct((B, T, vp), jnp.float32),
        grid_spec=pltpu.PrefetchScalarGridSpec(
            num_scalar_prefetch=0,
            grid=(B // bt,),
            in_specs=[
                pl.BlockSpec((bt, S, dp_in), lambda b: (b, 0, 0)),    # x
                pl.BlockSpec((bt, T, dp_tgt), lambda b: (b, 0, 0)),   # target
                pl.BlockSpec((dp_in, hp), full),                      # W_enc
                pl.BlockSpec((1, hp), full),                          # b_enc
                pl.BlockSpec((dp_tgt, hp), full),                     # W_dec
                pl.BlockSpec((1, hp), full),                          # b_dec
                pl.BlockSpec((hp, vp), full),                         # W_out_q
                pl.BlockSpec((hp, vp), full),                         # W_out_c
                pl.BlockSpec((1, vp), full),                          # b_out
            ],
            out_specs=pl.BlockSpec((bt, T, vp), lambda b: (b, 0, 0)),
        ),
        compiler_params=pltpu.CompilerParams(
            dimension_semantics=("parallel",)),
    )(xp, tp, w_enc_p, b_enc_p, w_dec_p, b_dec_p,
      w_out_q_p, w_out_c_p, b_out_p)

    return out[:, :, :V]


def init_params(key, d_in, d_tgt, hidden, vocab):
    ks = jax.random.split(key, 7)
    scale = 0.1
    w_enc = scale * jax.random.normal(ks[0], (d_in, hidden), jnp.float32)
    b_enc = jnp.zeros((1, hidden), jnp.float32)
    w_dec = scale * jax.random.normal(ks[1], (d_tgt, hidden), jnp.float32)
    b_dec = jnp.zeros((1, hidden), jnp.float32)
    w_out_q = scale * jax.random.normal(ks[2], (hidden, vocab), jnp.float32)
    w_out_c = scale * jax.random.normal(ks[3], (hidden, vocab), jnp.float32)
    b_out = jnp.zeros((1, vocab), jnp.float32)
    return (w_enc, b_enc, w_dec, b_dec, w_out_q, w_out_c, b_out)


def _reference_forward(x, target, params):
    (w_enc, b_enc, w_dec, b_dec, w_out_q, w_out_c, b_out) = params
    enc = jnp.tanh(x @ w_enc + b_enc)
    q = jnp.tanh(target @ w_dec + b_dec)
    scores = jnp.einsum("btd,bsd->bts", q, enc) / math.sqrt(q.shape[-1])
    attn = jax.nn.softmax(scores, axis=-1)
    ctx = jnp.einsum("bts,bsd->btd", attn, enc)
    return q @ w_out_q + ctx @ w_out_c + b_out


if __name__ == "__main__":
    B, S, T = 2, 8, 8
    D_IN, D_TGT, H, V = 16, 16, 32, 16

    key = jax.random.PRNGKey(0)
    kx, kt, kp = jax.random.split(key, 3)
    x = jax.random.normal(kx, (B, S, D_IN), jnp.float32)
    target = jax.random.normal(kt, (B, T, D_TGT), jnp.float32)
    params = init_params(kp, D_IN, D_TGT, H, V)

    out = attention_forward(x, target, params, teacher_force=1.0)
    out = jax.block_until_ready(out)

    ref = _reference_forward(x, target, params)
    assert out.shape == (B, T, V), out.shape
    # bf16 matmul operands (f32 accumulation) -> relaxed tolerance vs f32 ref.
    assert jnp.allclose(out, ref, atol=3e-2, rtol=3e-2), float(
        jnp.max(jnp.abs(out - ref)))

    print("KERNEL_OK")
</pallas_src>

<mosaic_0001>
module attributes {stable_mosaic.version = 11 : i64} {
  func.func @_attention_kernel(%arg0: i32, %arg1: memref<1x8x128xbf16, #tpu.memory_space<vmem>>, %arg2: memref<1x8x128xbf16, #tpu.memory_space<vmem>>, %arg3: memref<128x128xbf16, #tpu.memory_space<vmem>>, %arg4: memref<1x128xf32, #tpu.memory_space<vmem>>, %arg5: memref<128x128xbf16, #tpu.memory_space<vmem>>, %arg6: memref<1x128xf32, #tpu.memory_space<vmem>>, %arg7: memref<128x128xbf16, #tpu.memory_space<vmem>>, %arg8: memref<128x128xbf16, #tpu.memory_space<vmem>>, %arg9: memref<1x128xf32, #tpu.memory_space<vmem>>, %arg10: memref<1x8x128xf32, #tpu.memory_space<vmem>>) attributes {dimension_semantics = [#tpu.dimension_semantics<parallel>], iteration_bounds = array<i64: 2>, scalar_prefetch = 0 : i64, scratch_operands = 0 : i64, tpu.core_type = #tpu.core_type<tc>, window_params = [{transform_indices = @transform_0, window_bounds = array<i64: 1, 8, 128>}, {transform_indices = @transform_1, window_bounds = array<i64: 1, 8, 128>}, {pipeline_mode = #tpu.pipeline_mode<synchronous>, transform_indices = @transform_2, window_bounds = array<i64: 128, 128>}, {pipeline_mode = #tpu.pipeline_mode<synchronous>, transform_indices = @transform_3, window_bounds = array<i64: 1, 128>}, {pipeline_mode = #tpu.pipeline_mode<synchronous>, transform_indices = @transform_4, window_bounds = array<i64: 128, 128>}, {pipeline_mode = #tpu.pipeline_mode<synchronous>, transform_indices = @transform_5, window_bounds = array<i64: 1, 128>}, {pipeline_mode = #tpu.pipeline_mode<synchronous>, transform_indices = @transform_6, window_bounds = array<i64: 128, 128>}, {pipeline_mode = #tpu.pipeline_mode<synchronous>, transform_indices = @transform_7, window_bounds = array<i64: 128, 128>}, {pipeline_mode = #tpu.pipeline_mode<synchronous>, transform_indices = @transform_8, window_bounds = array<i64: 1, 128>}, {transform_indices = @transform_9, window_bounds = array<i64: 1, 8, 128>}]} {
    %c0 = arith.constant 0 : index
    %c0_0 = arith.constant 0 : index
    %c0_1 = arith.constant 0 : index
    %0 = vector.load %arg1[%c0, %c0_0, %c0_1] : memref<1x8x128xbf16, #tpu.memory_space<vmem>>, vector<1x8x128xbf16>
    %1 = vector.shape_cast %0 : vector<1x8x128xbf16> to vector<8x128xbf16>
    %c0_2 = arith.constant 0 : index
    %c0_3 = arith.constant 0 : index
    %2 = vector.load %arg3[%c0_2, %c0_3] : memref<128x128xbf16, #tpu.memory_space<vmem>>, vector<128x128xbf16>
    %cst = arith.constant dense<0.000000e+00> : vector<8x128xf32>
    %3 = tpu.matmul %1, %2, %cst {dimension_numbers = #tpu.dot_dimension_numbers<[1], [0], [0], [1], [0, 0, 1, 1], [], []>} : vector<8x128xbf16>, vector<128x128xbf16>, vector<8x128xf32> -> vector<8x128xf32>
    %c0_4 = arith.constant 0 : index
    %c0_5 = arith.constant 0 : index
    %4 = vector.load %arg4[%c0_4, %c0_5] : memref<1x128xf32, #tpu.memory_space<vmem>>, vector<1x128xf32>
    %5 = vector.broadcast %4 : vector<1x128xf32> to vector<8x128xf32>
    %6 = arith.addf %3, %5 : vector<8x128xf32>
    %7 = math.tanh %6 : vector<8x128xf32>
    %c0_6 = arith.constant 0 : index
    %c0_7 = arith.constant 0 : index
    %c0_8 = arith.constant 0 : index
    %8 = vector.load %arg2[%c0_6, %c0_7, %c0_8] : memref<1x8x128xbf16, #tpu.memory_space<vmem>>, vector<1x8x128xbf16>
    %9 = vector.shape_cast %8 : vector<1x8x128xbf16> to vector<8x128xbf16>
    %c0_9 = arith.constant 0 : index
    %c0_10 = arith.constant 0 : index
    %10 = vector.load %arg5[%c0_9, %c0_10] : memref<128x128xbf16, #tpu.memory_space<vmem>>, vector<128x128xbf16>
    %cst_11 = arith.constant dense<0.000000e+00> : vector<8x128xf32>
    %11 = tpu.matmul %9, %10, %cst_11 {dimension_numbers = #tpu.dot_dimension_numbers<[1], [0], [0], [1], [0, 0, 1, 1], [], []>} : vector<8x128xbf16>, vector<128x128xbf16>, vector<8x128xf32> -> vector<8x128xf32>
    %c0_12 = arith.constant 0 : index
    %c0_13 = arith.constant 0 : index
    %12 = vector.load %arg6[%c0_12, %c0_13] : memref<1x128xf32, #tpu.memory_space<vmem>>, vector<1x128xf32>
    %13 = vector.broadcast %12 : vector<1x128xf32> to vector<8x128xf32>
    %14 = arith.addf %11, %13 : vector<8x128xf32>
    %15 = math.tanh %14 : vector<8x128xf32>
    %16 = vector.shape_cast %7 : vector<8x128xf32> to vector<1x8x128xf32>
    %17 = arith.truncf %16 : vector<1x8x128xf32> to vector<1x8x128xbf16>
    %18 = vector.shape_cast %15 : vector<8x128xf32> to vector<1x8x128xf32>
    %19 = arith.truncf %18 : vector<1x8x128xf32> to vector<1x8x128xbf16>
    "tpu.trace_start"() <{level = 10 : i32, message = "btd,bsd->bts"}> : () -> ()
    %cst_14 = arith.constant dense<0.000000e+00> : vector<1x8x8xf32>
    %20 = tpu.matmul %19, %17, %cst_14 {dimension_numbers = #tpu.dot_dimension_numbers<[2], [2], [1], [1], [0, 0, 0, 1, 1, 1], [0], [0]>} : vector<1x8x128xbf16>, vector<1x8x128xbf16>, vector<1x8x8xf32> -> vector<1x8x8xf32>
    "tpu.trace_stop"() : () -> ()
    %cst_15 = arith.constant 0.176776692 : f32
    %21 = vector.broadcast %cst_15 : f32 to vector<1x8x8xf32>
    %22 = arith.mulf %20, %21 : vector<1x8x8xf32>
    %cst_16 = arith.constant dense<0xFF800000> : vector<1x8xf32>
    %23 = vector.multi_reduction <maximumf>, %22, %cst_16 [2] : vector<1x8x8xf32> to vector<1x8xf32>
    %24 = vector.shape_cast %23 : vector<1x8xf32> to vector<1x8x1xf32>
    %25 = vector.broadcast %24 : vector<1x8x1xf32> to vector<1x8x8xf32>
    %26 = arith.subf %22, %25 : vector<1x8x8xf32>
    %27 = math.exp %26 : vector<1x8x8xf32>
    %cst_17 = arith.constant dense<0.000000e+00> : vector<1x8xf32>
    %28 = vector.multi_reduction <add>, %27, %cst_17 [2] : vector<1x8x8xf32> to vector<1x8xf32>
    %29 = vector.shape_cast %28 : vector<1x8xf32> to vector<1x8x1xf32>
    %30 = tpu.reciprocal %29 {approx = true} : vector<1x8x1xf32> -> vector<1x8x1xf32>
    %31 = vector.broadcast %30 : vector<1x8x1xf32> to vector<1x8x8xf32>
    %32 = arith.mulf %27, %31 : vector<1x8x8xf32>
    %33 = arith.truncf %32 : vector<1x8x8xf32> to vector<1x8x8xbf16>
    "tpu.trace_start"() <{level = 10 : i32, message = "bts,bsd->btd"}> : () -> ()
    %cst_18 = arith.constant dense<0.000000e+00> : vector<1x8x128xf32>
    %34 = tpu.matmul %33, %17, %cst_18 {dimension_numbers = #tpu.dot_dimension_numbers<[2], [1], [1], [2], [0, 0, 0, 1, 1, 2], [0], [0]>} : vector<1x8x8xbf16>, vector<1x8x128xbf16>, vector<1x8x128xf32> -> vector<1x8x128xf32>
    "tpu.trace_stop"() : () -> ()
    %35 = vector.shape_cast %34 : vector<1x8x128xf32> to vector<8x128xf32>
    %36 = arith.truncf %35 : vector<8x128xf32> to vector<8x128xbf16>
    %37 = vector.shape_cast %19 : vector<1x8x128xbf16> to vector<8x128xbf16>
    %c0_19 = arith.constant 0 : index
    %c0_20 = arith.constant 0 : index
    %38 = vector.load %arg7[%c0_19, %c0_20] : memref<128x128xbf16, #tpu.memory_space<vmem>>, vector<128x128xbf16>
    %cst_21 = arith.constant dense<0.000000e+00> : vector<8x128xf32>
    %39 = tpu.matmul %37, %38, %cst_21 {dimension_numbers = #tpu.dot_dimension_numbers<[1], [0], [0], [1], [0, 0, 1, 1], [], []>} : vector<8x128xbf16>, vector<128x128xbf16>, vector<8x128xf32> -> vector<8x128xf32>
    %c0_22 = arith.constant 0 : index
    %c0_23 = arith.constant 0 : index
    %40 = vector.load %arg8[%c0_22, %c0_23] : memref<128x128xbf16, #tpu.memory_space<vmem>>, vector<128x128xbf16>
    %cst_24 = arith.constant dense<0.000000e+00> : vector<8x128xf32>
    %41 = tpu.matmul %36, %40, %cst_24 {dimension_numbers = #tpu.dot_dimension_numbers<[1], [0], [0], [1], [0, 0, 1, 1], [], []>} : vector<8x128xbf16>, vector<128x128xbf16>, vector<8x128xf32> -> vector<8x128xf32>
    %42 = arith.addf %39, %41 : vector<8x128xf32>
    %c0_25 = arith.constant 0 : index
    %c0_26 = arith.constant 0 : index
    %43 = vector.load %arg9[%c0_25, %c0_26] : memref<1x128xf32, #tpu.memory_space<vmem>>, vector<1x128xf32>
    %44 = vector.broadcast %43 : vector<1x128xf32> to vector<8x128xf32>
    %45 = arith.addf %42, %44 : vector<8x128xf32>
    %46 = vector.shape_cast %45 : vector<8x128xf32> to vector<1x8x128xf32>
    %c0_27 = arith.constant 0 : index
    %c0_28 = arith.constant 0 : index
    %c0_29 = arith.constant 0 : index
    %47 = vector.load %arg10[%c0_27, %c0_28, %c0_29] : memref<1x8x128xf32, #tpu.memory_space<vmem>>, vector<1x8x128xf32>
    tpu.vector_store %arg10[%c0_27, %c0_28, %c0_29], %46 {strides = array<i32>} : memref<1x8x128xf32, #tpu.memory_space<vmem>>, vector<1x8x128xf32>,
    return
  }
  func.func @transform_0(%arg0: i32) -> (i32, i32, i32) {
    %c0_i32 = arith.constant 0 : i32
    %c0_i32_0 = arith.constant 0 : i32
    %c0_i32_1 = arith.constant 0 : i32
    return %arg0, %c0_i32, %c0_i32_0 : i32, i32, i32
  }
  func.func @transform_1(%arg0: i32) -> (i32, i32, i32) {
    %c0_i32 = arith.constant 0 : i32
    %c0_i32_0 = arith.constant 0 : i32
    %c0_i32_1 = arith.constant 0 : i32
    return %arg0, %c0_i32, %c0_i32_0 : i32, i32, i32
  }
  func.func @transform_2(%arg0: i32) -> (i32, i32) {
    %c0_i32 = arith.constant 0 : i32
    %c0_i32_0 = arith.constant 0 : i32
    %c0_i32_1 = arith.constant 0 : i32
    return %c0_i32, %c0_i32_0 : i32, i32
  }
  func.func @transform_3(%arg0: i32) -> (i32, i32) {
    %c0_i32 = arith.constant 0 : i32
    %c0_i32_0 = arith.constant 0 : i32
    %c0_i32_1 = arith.constant 0 : i32
    return %c0_i32, %c0_i32_0 : i32, i32
  }
  func.func @transform_4(%arg0: i32) -> (i32, i32) {
    %c0_i32 = arith.constant 0 : i32
    %c0_i32_0 = arith.constant 0 : i32
    %c0_i32_1 = arith.constant 0 : i32
    return %c0_i32, %c0_i32_0 : i32, i32
  }
  func.func @transform_5(%arg0: i32) -> (i32, i32) {
    %c0_i32 = arith.constant 0 : i32
    %c0_i32_0 = arith.constant 0 : i32
    %c0_i32_1 = arith.constant 0 : i32
    return %c0_i32, %c0_i32_0 : i32, i32
  }
  func.func @transform_6(%arg0: i32) -> (i32, i32) {
    %c0_i32 = arith.constant 0 : i32
    %c0_i32_0 = arith.constant 0 : i32
    %c0_i32_1 = arith.constant 0 : i32
    return %c0_i32, %c0_i32_0 : i32, i32
  }
  func.func @transform_7(%arg0: i32) -> (i32, i32) {
    %c0_i32 = arith.constant 0 : i32
    %c0_i32_0 = arith.constant 0 : i32
    %c0_i32_1 = arith.constant 0 : i32
    return %c0_i32, %c0_i32_0 : i32, i32
  }
  func.func @transform_8(%arg0: i32) -> (i32, i32) {
    %c0_i32 = arith.constant 0 : i32
    %c0_i32_0 = arith.constant 0 : i32
    %c0_i32_1 = arith.constant 0 : i32
    return %c0_i32, %c0_i32_0 : i32, i32
  }
  func.func @transform_9(%arg0: i32) -> (i32, i32, i32) {
    %c0_i32 = arith.constant 0 : i32
    %c0_i32_0 = arith.constant 0 : i32
    %c0_i32_1 = arith.constant 0 : i32
    return %arg0, %c0_i32, %c0_i32_0 : i32, i32, i32
  }
}

</mosaic_0001>

<llo_original>
// kernel: tpu_custom_call.1
$region0: #{tpu_custom_call.1}
  #allocation0 [shape = 'u32[]', space=smem, size = 0x4, offset = 0x4, fixed_abs, tag = 'smem constant byte address 0x4 - core index']
  #allocation1 [shape = 'u32[144,128]{1,0:T(1,128)}', space=vmem, size = 0x12000, scoped, tag = 'internal scratch']
  %s0 = inlined_call_operand.hbm [shape: bf16[2,8,128], index: 0, kind: input, shape index: {}]
  %s1 = inlined_call_operand.hbm [shape: bf16[2,8,128], index: 1, kind: input, shape index: {}]
  %s2 = inlined_call_operand.hbm [shape: bf16[128,128], index: 2, kind: input, shape index: {}]
  %s3 = inlined_call_operand.vmem [shape: f32[1,128], index: 3, kind: input, shape index: {}]
  %s4 = inlined_call_operand.hbm [shape: bf16[128,128], index: 4, kind: input, shape index: {}]
  %s5 = inlined_call_operand.vmem [shape: f32[1,128], index: 5, kind: input, shape index: {}]
  %s6 = inlined_call_operand.hbm [shape: bf16[128,128], index: 6, kind: input, shape index: {}]
  %s7 = inlined_call_operand.hbm [shape: bf16[128,128], index: 7, kind: input, shape index: {}]
  %s8 = inlined_call_operand.vmem [shape: f32[1,128], index: 8, kind: input, shape index: {}]
  %s9 = inlined_call_operand.hbm [shape: f32[2,8,128], index: 9, kind: output, shape index: {}]
  %s10 = sld [smem:[#allocation0]]
  $region93: #{tpu_custom_call.1} parent=0
    _
  %s12 = ssub.s32 1, %s10
  %s13 = scalar_select 0, %s12, %s10
  $region1: #{tpu_custom_call.1} parent=0
    #allocation2 [shape = 'u8[4096]{0}', space=vmem, size = 0x1000, scoped, tag = 'input window, operand 0']
    #allocation3 [shape = 's32[2]{0}', space=sflag, size = 0x8, scoped, tag = 'scoped memory for tpu_custom_call.1']
    #allocation4 [shape = 's32[2]{0}', space=sflag, size = 0x8, scoped, tag = 'scoped memory for tpu_custom_call.1']
    #allocation5 [shape = 'u8[4096]{0}', space=vmem, size = 0x1000, scoped, tag = 'input window, operand 1']
    #allocation6 [shape = 's32[2]{0}', space=sflag, size = 0x8, scoped, tag = 'scoped memory for tpu_custom_call.1']
    #allocation7 [shape = 'u8[32768]{0}', space=vmem, size = 0x8000, scoped, tag = 'input window, operand 2, single buffered']
    #allocation8 [shape = 'u8[32768]{0}', space=vmem, size = 0x8000, scoped, tag = 'input window, operand 4, single buffered']
    #allocation9 [shape = 's32[1]{0}', space=sflag, size = 0x4, scoped, tag = 'scoped memory for tpu_custom_call.1']
    #allocation10 [shape = 'u8[32768]{0}', space=vmem, size = 0x8000, scoped, tag = 'input window, operand 6, single buffered']
    #allocation11 [shape = 'u8[32768]{0}', space=vmem, size = 0x8000, scoped, tag = 'input window, operand 7, single buffered']
    #allocation12 [shape = 's32[1]{0}', space=sflag, size = 0x4, scoped, tag = 'scoped memory for tpu_custom_call.1']
    #allocation13 [shape = 'u8[8192]{0}', space=vmem, size = 0x2000, scoped, tag = 'output window, operand 0']
    %14 = vsyncpa [#allocation3], 0
    %s15 = scalar_lea.sflag [#allocation3], 1
    %16 = vsyncpa %s15, 0
    %17 = vsyncpa [#allocation6], 0
    %s18 = scalar_lea.sflag [#allocation6], 1
    %19 = vsyncpa %s18, 0
    %20 = vsyncpa [#allocation9], 0
    %21 = vsyncpa [#allocation12], 0
    %22 = vsyncpa [#allocation4], 0
    %s23 = scalar_lea.sflag [#allocation4], 1
    %24 = vsyncpa %s23, 0
    loop: start=0, step=1, limit=4
    $region2: #{tpu_custom_call.1} parent=1 // loop_pre_header
      _
    $region3: #{tpu_custom_call.1} parent=1 // loop_header
      %s26 = sphi 0, %s30
      %p27 = scmp.ge.s32.totalorder %s26, 4
      %s36 = sphi 0, %s38
      %s39 = sphi 0, %s36
      %s40 = sphi 0, %s39
      %s56 = sphi 0, %s40
      %s62 = sphi 0, %s64
      %s65 = sphi 0, %s62
      %s66 = sphi 0, %s65
      %s82 = sphi 0, %s66
      %s86 = sphi 0, %s86
      %s88 = sphi 0, %s86
      %s89 = sphi 0, %s88
      %s103 = sphi 0, %s89
      %s107 = sphi 0, %s107
      %s109 = sphi 0, %s107
      %s110 = sphi 0, %s109
      %s124 = sphi 0, %s110
      %s128 = sphi 0, %s128
      %s130 = sphi 0, %s128
      %s131 = sphi 0, %s130
      %s145 = sphi 0, %s131
      %s149 = sphi 0, %s149
      %s151 = sphi 0, %s149
      %s152 = sphi 0, %s151
      %s166 = sphi 0, %s152
      %s170 = sphi 0, %s170
      %s172 = sphi 0, %s170
      %s173 = sphi 0, %s172
      %s187 = sphi 0, %s173
      %s191 = sphi 0, %s191
      %s193 = sphi 0, %s191
      %s194 = sphi 0, %s193
      %s208 = sphi 0, %s194
      %s212 = sphi 0, %s212
      %s214 = sphi 0, %s212
      %s215 = sphi 0, %s214
      %s229 = sphi 0, %s215
      %s235 = sphi 0, %s237
      %s238 = sphi 0, %s235
      %s239 = sphi 0, %s238
      %s255 = sphi 0, %s239
    $region4: #{tpu_custom_call.1} parent=1 // loop_header_branch
      %29 = sbr.rel (%p27) target = $region8
    $region5: #{tpu_custom_call.1} parent=1 // loop_body
      %s31 = ssub.s32 %s26, 1
      %s32 = ssub.s32 %s26, 2
      %s33 = sadd.s32 %s26, 1
      %s34 = ssub.s32 %s26, %s33
      %p35 = scmp.eq.s32.totalorder %s34, 0
      %s37 = sadd.s32 %s36, 1
      %s38 = scalar_select %p35, %s36, %s37
      %p41 = pneg %p35
      %p42 = scmp.eq.s32.totalorder %s26, 1
      %p43 = por %p41, %p42
      %p44 = scmp.ne.s32.totalorder %s36, %s39
      %p45 = scmp.eq.s32.totalorder %s26, 0
      %p46 = por %p44, %p45
      %p47 = scmp.ne.s32.totalorder %s36, %s39
      %p48 = scmp.eq.s32.totalorder %s31, 1
      %p49 = por %p47, %p48
      %p50 = scmp.ne.s32.totalorder %s39, %s40
      %p51 = scmp.eq.s32.totalorder %s31, 0
      %p52 = por %p50, %p51
      %p53 = scmp.ne.s32.totalorder %s39, %s40
      %p54 = scmp.eq.s32.totalorder %s32, 1
      %p55 = por %p53, %p54
      %p57 = scmp.ne.s32.totalorder %s40, %s56
      %p58 = scmp.eq.s32.totalorder %s32, 0
      %p59 = por %p57, %p58
      %s60 = ssub.s32 %s26, %s33
      %p61 = scmp.eq.s32.totalorder %s60, 0
      %s63 = sadd.s32 %s62, 1
      %s64 = scalar_select %p61, %s62, %s63
      %p67 = pneg %p61
      %p68 = scmp.eq.s32.totalorder %s26, 1
      %p69 = por %p67, %p68
      %p70 = scmp.ne.s32.totalorder %s62, %s65
      %p71 = scmp.eq.s32.totalorder %s26, 0
      %p72 = por %p70, %p71
      %p73 = scmp.ne.s32.totalorder %s62, %s65
      %p74 = scmp.eq.s32.totalorder %s31, 1
      %p75 = por %p73, %p74
      %p76 = scmp.ne.s32.totalorder %s65, %s66
      %p77 = scmp.eq.s32.totalorder %s31, 0
      %p78 = por %p76, %p77
      %p79 = scmp.ne.s32.totalorder %s65, %s66
      %p80 = scmp.eq.s32.totalorder %s32, 1
      %p81 = por %p79, %p80
      %p83 = scmp.ne.s32.totalorder %s66, %s82
      %p84 = scmp.eq.s32.totalorder %s32, 0
      %p85 = por %p83, %p84
      %s87 = sadd.s32 %s86, 1
      %p90 = scmp.eq.s32.totalorder %s26, 1
      %p91 = scmp.ne.s32.totalorder %s86, %s88
      %p92 = scmp.eq.s32.totalorder %s26, 0
      %p93 = por %p91, %p92
      %p94 = scmp.ne.s32.totalorder %s86, %s88
      %p95 = scmp.eq.s32.totalorder %s31, 1
      %p96 = por %p94, %p95
      %p97 = scmp.ne.s32.totalorder %s88, %s89
      %p98 = scmp.eq.s32.totalorder %s31, 0
      %p99 = por %p97, %p98
      %p100 = scmp.ne.s32.totalorder %s88, %s89
      %p101 = scmp.eq.s32.totalorder %s32, 1
      %p102 = por %p100, %p101
      %p104 = scmp.ne.s32.totalorder %s89, %s103
      %p105 = scmp.eq.s32.totalorder %s32, 0
      %p106 = por %p104, %p105
      %s108 = sadd.s32 %s107, 1
      %p111 = scmp.eq.s32.totalorder %s26, 1
      %p112 = scmp.ne.s32.totalorder %s107, %s109
      %p113 = scmp.eq.s32.totalorder %s26, 0
      %p114 = por %p112, %p113
      %p115 = scmp.ne.s32.totalorder %s107, %s109
      %p116 = scmp.eq.s32.totalorder %s31, 1
      %p117 = por %p115, %p116
      %p118 = scmp.ne.s32.totalorder %s109, %s110
      %p119 = scmp.eq.s32.totalorder %s31, 0
      %p120 = por %p118, %p119
      %p121 = scmp.ne.s32.totalorder %s109, %s110
      %p122 = scmp.eq.s32.totalorder %s32, 1
      %p123 = por %p121, %p122
      %p125 = scmp.ne.s32.totalorder %s110, %s124
      %p126 = scmp.eq.s32.totalorder %s32, 0
      %p127 = por %p125, %p126
      %s129 = sadd.s32 %s128, 1
      %p132 = scmp.eq.s32.totalorder %s26, 1
      %p133 = scmp.ne.s32.totalorder %s128, %s130
      %p134 = scmp.eq.s32.totalorder %s26, 0
      %p135 = por %p133, %p134
      %p136 = scmp.ne.s32.totalorder %s128, %s130
      %p137 = scmp.eq.s32.totalorder %s31, 1
      %p138 = por %p136, %p137
      %p139 = scmp.ne.s32.totalorder %s130, %s131
      %p140 = scmp.eq.s32.totalorder %s31, 0
      %p141 = por %p139, %p140
      %p142 = scmp.ne.s32.totalorder %s130, %s131
      %p143 = scmp.eq.s32.totalorder %s32, 1
      %p144 = por %p142, %p143
      %p146 = scmp.ne.s32.totalorder %s131, %s145
      %p147 = scmp.eq.s32.totalorder %s32, 0
      %p148 = por %p146, %p147
      %s150 = sadd.s32 %s149, 1
      %p153 = scmp.eq.s32.totalorder %s26, 1
      %p154 = scmp.ne.s32.totalorder %s149, %s151
      %p155 = scmp.eq.s32.totalorder %s26, 0
      %p156 = por %p154, %p155
      %p157 = scmp.ne.s32.totalorder %s149, %s151
      %p158 = scmp.eq.s32.totalorder %s31, 1
      %p159 = por %p157, %p158
      %p160 = scmp.ne.s32.totalorder %s151, %s152
      %p161 = scmp.eq.s32.totalorder %s31, 0
      %p162 = por %p160, %p161
      %p163 = scmp.ne.s32.totalorder %s151, %s152
      %p164 = scmp.eq.s32.totalorder %s32, 1
      %p165 = por %p163, %p164
      %p167 = scmp.ne.s32.totalorder %s152, %s166
      %p168 = scmp.eq.s32.totalorder %s32, 0
      %p169 = por %p167, %p168
      %s171 = sadd.s32 %s170, 1
      %p174 = scmp.eq.s32.totalorder %s26, 1
      %p175 = scmp.ne.s32.totalorder %s170, %s172
      %p176 = scmp.eq.s32.totalorder %s26, 0
      %p177 = por %p175, %p176
      %p178 = scmp.ne.s32.totalorder %s170, %s172
      %p179 = scmp.eq.s32.totalorder %s31, 1
      %p180 = por %p178, %p179
      %p181 = scmp.ne.s32.totalorder %s172, %s173
      %p182 = scmp.eq.s32.totalorder %s31, 0
      %p183 = por %p181, %p182
      %p184 = scmp.ne.s32.totalorder %s172, %s173
      %p185 = scmp.eq.s32.totalorder %s32, 1
      %p186 = por %p184, %p185
      %p188 = scmp.ne.s32.totalorder %s173, %s187
      %p189 = scmp.eq.s32.totalorder %s32, 0
      %p190 = por %p188, %p189
      %s192 = sadd.s32 %s191, 1
      %p195 = scmp.eq.s32.totalorder %s26, 1
      %p196 = scmp.ne.s32.totalorder %s191, %s193
      %p197 = scmp.eq.s32.totalorder %s26, 0
      %p198 = por %p196, %p197
      %p199 = scmp.ne.s32.totalorder %s191, %s193
      %p200 = scmp.eq.s32.totalorder %s31, 1
      %p201 = por %p199, %p200
      %p202 = scmp.ne.s32.totalorder %s193, %s194
      %p203 = scmp.eq.s32.totalorder %s31, 0
      %p204 = por %p202, %p203
      %p205 = scmp.ne.s32.totalorder %s193, %s194
      %p206 = scmp.eq.s32.totalorder %s32, 1
      %p207 = por %p205, %p206
      %p209 = scmp.ne.s32.totalorder %s194, %s208
      %p210 = scmp.eq.s32.totalorder %s32, 0
      %p211 = por %p209, %p210
      %s213 = sadd.s32 %s212, 1
      %p216 = scmp.eq.s32.totalorder %s26, 1
      %p217 = scmp.ne.s32.totalorder %s212, %s214
      %p218 = scmp.eq.s32.totalorder %s26, 0
      %p219 = por %p217, %p218
      %p220 = scmp.ne.s32.totalorder %s212, %s214
      %p221 = scmp.eq.s32.totalorder %s31, 1
      %p222 = por %p220, %p221
      %p223 = scmp.ne.s32.totalorder %s214, %s215
      %p224 = scmp.eq.s32.totalorder %s31, 0
      %p225 = por %p223, %p224
      %p226 = scmp.ne.s32.totalorder %s214, %s215
      %p227 = scmp.eq.s32.totalorder %s32, 1
      %p228 = por %p226, %p227
      %p230 = scmp.ne.s32.totalorder %s215, %s229
      %p231 = scmp.eq.s32.totalorder %s32, 0
      %p232 = por %p230, %p231
      %s233 = ssub.s32 %s26, %s33
      %p234 = scmp.eq.s32.totalorder %s233, 0
      %s236 = sadd.s32 %s235, 1
      %s237 = scalar_select %p234, %s235, %s236
      %p240 = pneg %p234
      %p241 = scmp.eq.s32.totalorder %s26, 1
      %p242 = por %p240, %p241
      %p243 = scmp.ne.s32.totalorder %s235, %s238
      %p244 = scmp.eq.s32.totalorder %s26, 0
      %p245 = por %p243, %p244
      %p246 = scmp.ne.s32.totalorder %s235, %s238
      %p247 = scmp.eq.s32.totalorder %s31, 1
      %p248 = por %p246, %p247
      %p249 = scmp.ne.s32.totalorder %s238, %s239
      %p250 = scmp.eq.s32.totalorder %s31, 0
      %p251 = por %p249, %p250
      %p252 = scmp.ne.s32.totalorder %s238, %s239
      %p253 = scmp.eq.s32.totalorder %s32, 1
      %p254 = por %p252, %p253
      %p256 = scmp.ne.s32.totalorder %s239, %s255
      %p257 = scmp.eq.s32.totalorder %s32, 0
      %p258 = por %p256, %p257
      %p259 = scmp.le.s32.totalorder 1, %s26
      %p260 = scmp.lt.s32.totalorder %s26, 3
      %p261 = pnand %p259, %p260
      %p262 = pneg %p261
      // Predicated region
      $region9: #{tpu_custom_call.1} parent=5 // pred_check
        _
      $region10: #{tpu_custom_call.1} parent=5 // pred_check_branch
        %264 = sbr.rel (%p261) target = $region12
      $region11: #{tpu_custom_call.1} parent=5 // pred_region
        %s265 = ssub.s32 %s26, 1
        // Predicated region
        $region13: #{tpu_custom_call.1} parent=11 // pred_check
          %p266 = pneg %p99
        $region14: #{tpu_custom_call.1} parent=11 // pred_check_branch
          %268 = sbr.rel (%p266) target = $region16
        $region15: #{tpu_custom_call.1} parent=11 // pred_region
          %s270 = ssub.s32 1024, 1024
          %271 = vsyncadd [#allocation6], %s270
          %s272 = sshll.u32 [#allocation7], 4
          %s273 = int_to_ptr.vmem [resolvable:$true] %s272
          %278 = dma.hbm_to_vmem [thread:$0]  %s2, 1024, %s273, [#allocation6], 64, 64, 4
        $region16: #{tpu_custom_call.1} parent=11 // pred_fallthru
          _
        // Predicated region
        $region17: #{tpu_custom_call.1} parent=11 // pred_check
          %p279 = pneg %p120
        $region18: #{tpu_custom_call.1} parent=11 // pred_check_branch
          %281 = sbr.rel (%p279) target = $region20
        $region19: #{tpu_custom_call.1} parent=11 // pred_region
          _
        $region20: #{tpu_custom_call.1} parent=11 // pred_fallthru
          _
        // Predicated region
        $region21: #{tpu_custom_call.1} parent=11 // pred_check
          %p282 = pneg %p141
        $region22: #{tpu_custom_call.1} parent=11 // pred_check_branch
          %284 = sbr.rel (%p282) target = $region24
        $region23: #{tpu_custom_call.1} parent=11 // pred_region
          %s286 = ssub.s32 1024, 1024
          %287 = vsyncadd [#allocation9], %s286
          %s288 = sshll.u32 [#allocation8], 4
          %s289 = int_to_ptr.vmem [resolvable:$true] %s288
          %294 = dma.hbm_to_vmem [thread:$0]  %s4, 1024, %s289, [#allocation9], 64, 64, 4
        $region24: #{tpu_custom_call.1} parent=11 // pred_fallthru
          _
        // Predicated region
        $region25: #{tpu_custom_call.1} parent=11 // pred_check
          %p295 = pneg %p162
        $region26: #{tpu_custom_call.1} parent=11 // pred_check_branch
          %297 = sbr.rel (%p295) target = $region28
        $region27: #{tpu_custom_call.1} parent=11 // pred_region
          _
        $region28: #{tpu_custom_call.1} parent=11 // pred_fallthru
          _
        // Predicated region
        $region29: #{tpu_custom_call.1} parent=11 // pred_check
          %p298 = pneg %p183
        $region30: #{tpu_custom_call.1} parent=11 // pred_check_branch
          %300 = sbr.rel (%p298) target = $region32
        $region31: #{tpu_custom_call.1} parent=11 // pred_region
          %s302 = ssub.s32 1024, 1024
          %303 = vsyncadd [#allocation9], %s302
          %s304 = sshll.u32 [#allocation10], 4
          %s305 = int_to_ptr.vmem [resolvable:$true] %s304
          %310 = dma.hbm_to_vmem [thread:$0]  %s6, 1024, %s305, [#allocation9], 64, 64, 4
        $region32: #{tpu_custom_call.1} parent=11 // pred_fallthru
          _
        // Predicated region
        $region33: #{tpu_custom_call.1} parent=11 // pred_check
          %p311 = pneg %p204
        $region34: #{tpu_custom_call.1} parent=11 // pred_check_branch
          %313 = sbr.rel (%p311) target = $region36
        $region35: #{tpu_custom_call.1} parent=11 // pred_region
          %s315 = ssub.s32 1024, 1024
          %316 = vsyncadd [#allocation12], %s315
          %s317 = sshll.u32 [#allocation11], 4
          %s318 = int_to_ptr.vmem [resolvable:$true] %s317
          %323 = dma.hbm_to_vmem [thread:$0]  %s7, 1024, %s318, [#allocation12], 64, 64, 4
        $region36: #{tpu_custom_call.1} parent=11 // pred_fallthru
          _
        // Predicated region
        $region37: #{tpu_custom_call.1} parent=11 // pred_check
          %p324 = pneg %p225
        $region38: #{tpu_custom_call.1} parent=11 // pred_check_branch
          %326 = sbr.rel (%p324) target = $region40
        $region39: #{tpu_custom_call.1} parent=11 // pred_region
          _
        $region40: #{tpu_custom_call.1} parent=11 // pred_fallthru
          _
      $region12: #{tpu_custom_call.1} parent=5 // pred_fallthru
        _
      %p327 = scmp.lt.s32.totalorder %s26, 2
      // Predicated region
      $region41: #{tpu_custom_call.1} parent=5 // pred_check
        %p328 = pneg %p327
      $region42: #{tpu_custom_call.1} parent=5 // pred_check_branch
        %330 = sbr.rel (%p328) target = $region44
      $region43: #{tpu_custom_call.1} parent=5 // pred_region
        // Predicated region
        $region45: #{tpu_custom_call.1} parent=43 // pred_check
          %p331 = pneg %p46
        $region46: #{tpu_custom_call.1} parent=43 // pred_check_branch
          %333 = sbr.rel (%p331) target = $region48
        $region47: #{tpu_custom_call.1} parent=43 // pred_region
          %s334 = sand.u32 %s36, 1
          %s335 = scalar_lea.sflag [#allocation3], %s334
          %s336 = sand.u32 %s36, 1
          %s337 = smul.addr %s336, 4
          %s338 = scalar_lea.vmem [#allocation2], %s337
          %s340 = ssub.s32 64, 64
          %341 = vsyncadd %s335, %s340
          %s342 = smul.addr %s26, 64
          %s343 = scalar_lea.hbm %s0, %s342
          %s345 = sshll.u32 %s338, 4
          %s346 = int_to_ptr.vmem [resolvable:$true] %s345
          %348 = dma.hbm_to_vmem [thread:$0]  %s343, 64, %s346, %s335
        $region48: #{tpu_custom_call.1} parent=43 // pred_fallthru
          _
        // Predicated region
        $region49: #{tpu_custom_call.1} parent=43 // pred_check
          %p349 = pneg %p72
        $region50: #{tpu_custom_call.1} parent=43 // pred_check_branch
          %351 = sbr.rel (%p349) target = $region52
        $region51: #{tpu_custom_call.1} parent=43 // pred_region
          %s352 = sand.u32 %s26, 1
          %s353 = scalar_lea.sflag [#allocation6], %s352
          %s354 = sand.u32 %s62, 1
          %s355 = smul.addr %s354, 4
          %s356 = scalar_lea.vmem [#allocation5], %s355
          %s358 = ssub.s32 64, 64
          %359 = vsyncadd %s353, %s358
          %s360 = smul.addr %s26, 64
          %s361 = scalar_lea.hbm %s1, %s360
          %s363 = sshll.u32 %s356, 4
          %s364 = int_to_ptr.vmem [resolvable:$true] %s363
          %366 = dma.hbm_to_vmem [thread:$0]  %s361, 64, %s364, %s353
        $region52: #{tpu_custom_call.1} parent=43 // pred_fallthru
          _
      $region44: #{tpu_custom_call.1} parent=5 // pred_fallthru
        _
      %p367 = scmp.le.s32.totalorder 1, %s26
      %p368 = scmp.lt.s32.totalorder %s26, 3
      %p369 = pnand %p367, %p368
      %p370 = pneg %p369
      // Predicated region
      $region53: #{tpu_custom_call.1} parent=5 // pred_check
        _
      $region54: #{tpu_custom_call.1} parent=5 // pred_check_branch
        %372 = sbr.rel (%p369) target = $region56
      $region55: #{tpu_custom_call.1} parent=5 // pred_region
        %s373 = ssub.s32 %s26, 1
        %s374 = sand.u32 %s39, 1
        %s375 = scalar_lea.sflag [#allocation3], %s374
        %s376 = sand.u32 %s39, 1
        %s377 = smul.addr %s376, 4
        %s378 = scalar_lea.vmem [#allocation2], %s377
        // Predicated region
        $region57: #{tpu_custom_call.1} parent=55 // pred_check
          %p379 = pneg %p52
        $region58: #{tpu_custom_call.1} parent=55 // pred_check_branch
          %381 = sbr.rel (%p379) target = $region60
        $region59: #{tpu_custom_call.1} parent=55 // pred_region
          %382 = dma.done %s375, 64
        $region60: #{tpu_custom_call.1} parent=55 // pred_fallthru
          _
        %s383 = sand.u32 %s31, 1
        %s384 = scalar_lea.sflag [#allocation6], %s383
        %s385 = sand.u32 %s65, 1
        %s386 = smul.addr %s385, 4
        %s387 = scalar_lea.vmem [#allocation5], %s386
        // Predicated region
        $region61: #{tpu_custom_call.1} parent=55 // pred_check
          %p388 = pneg %p78
        $region62: #{tpu_custom_call.1} parent=55 // pred_check_branch
          %390 = sbr.rel (%p388) target = $region64
        $region63: #{tpu_custom_call.1} parent=55 // pred_region
          %391 = dma.done %s384, 64
        $region64: #{tpu_custom_call.1} parent=55 // pred_fallthru
          _
        // Predicated region
        $region65: #{tpu_custom_call.1} parent=55 // pred_check
          %p392 = pneg %p99
        $region66: #{tpu_custom_call.1} parent=55 // pred_check_branch
          %394 = sbr.rel (%p392) target = $region68
        $region67: #{tpu_custom_call.1} parent=55 // pred_region
          %395 = dma.done [#allocation6], 1024
        $region68: #{tpu_custom_call.1} parent=55 // pred_fallthru
          _
        // Predicated region
        $region69: #{tpu_custom_call.1} parent=55 // pred_check
          %p396 = pneg %p141
        $region70: #{tpu_custom_call.1} parent=55 // pred_check_branch
          %398 = sbr.rel (%p396) target = $region72
        $region71: #{tpu_custom_call.1} parent=55 // pred_region
          %399 = dma.done [#allocation9], 1024
        $region72: #{tpu_custom_call.1} parent=55 // pred_fallthru
          _
        // Predicated region
        $region73: #{tpu_custom_call.1} parent=55 // pred_check
          %p400 = pneg %p183
        $region74: #{tpu_custom_call.1} parent=55 // pred_check_branch
          %402 = sbr.rel (%p400) target = $region76
        $region75: #{tpu_custom_call.1} parent=55 // pred_region
          %403 = dma.done [#allocation9], 1024
        $region76: #{tpu_custom_call.1} parent=55 // pred_fallthru
          _
        // Predicated region
        $region77: #{tpu_custom_call.1} parent=55 // pred_check
          %p404 = pneg %p204
        $region78: #{tpu_custom_call.1} parent=55 // pred_check_branch
          %406 = sbr.rel (%p404) target = $region80
        $region79: #{tpu_custom_call.1} parent=55 // pred_region
          %407 = dma.done [#allocation12], 1024
        $region80: #{tpu_custom_call.1} parent=55 // pred_fallthru
          _
        %s408 = sand.u32 %s39, 1
        %s409 = scalar_lea.sflag [#allocation3], %s408
        %s410 = sand.u32 %s39, 1
        %s411 = smul.addr %s410, 4
        %s412 = scalar_lea.vmem [#allocation2], %s411
        %p413 = pneg %p52
        %p414 = pneg %p49
        %s415 = sand.u32 %s31, 1
        %s416 = scalar_lea.sflag [#allocation6], %s415
        %s417 = sand.u32 %s65, 1
        %s418 = smul.addr %s417, 4
        %s419 = scalar_lea.vmem [#allocation5], %s418
        %p420 = pneg %p78
        %p421 = pneg %p75
        %p422 = pneg %p99
        %p423 = pneg %p96
        %p424 = pneg %p120
        %p425 = pneg %p117
        %p426 = pneg %p141
        %p427 = pneg %p138
        %p428 = pneg %p162
        %p429 = pneg %p159
        %p430 = pneg %p183
        %p431 = pneg %p180
        %p432 = pneg %p204
        %p433 = pneg %p201
        %p434 = pneg %p225
        %p435 = pneg %p222
        %p436 = pneg %p251
        %p437 = pneg %p248
        %s438 = sand.u32 %s238, 1
        %s439 = scalar_lea.sflag [#allocation4], %s438
        %s440 = sand.u32 %s238, 1
        %s441 = smul.addr %s440, 8
        %s442 = scalar_lea.vmem [#allocation13], %s441
        %v444 = vld [vmem:[%s378] sm:$0xf]
        %v445 = vld [vmem:[#allocation7] sm:$0xf]
        %v446 = vld [vmem:[#allocation7 + $0x4] sm:$0xf]
        %v447 = vld [vmem:[#allocation7 + $0x8] sm:$0xf]
        %v448 = vld [vmem:[#allocation7 + $0xc] sm:$0xf]
        %v449 = vld [vmem:[#allocation7 + $0x10] sm:$0xf]
        %v450 = vld [vmem:[#allocation7 + $0x14] sm:$0xf]
        %v451 = vld [vmem:[#allocation7 + $0x18] sm:$0xf]
        %v452 = vld [vmem:[#allocation7 + $0x1c] sm:$0xf]
        %v453 = vld [vmem:[#allocation7 + $0x20] sm:$0xf]
        %v454 = vld [vmem:[#allocation7 + $0x24] sm:$0xf]
        %v455 = vld [vmem:[#allocation7 + $0x28] sm:$0xf]
        %v456 = vld [vmem:[#allocation7 + $0x2c] sm:$0xf]
        %v457 = vld [vmem:[#allocation7 + $0x30] sm:$0xf]
        %v458 = vld [vmem:[#allocation7 + $0x34] sm:$0xf]
        %v459 = vld [vmem:[#allocation7 + $0x38] sm:$0xf]
        %v460 = vld [vmem:[#allocation7 + $0x3c] sm:$0xf]
        %v461 = vld [vmem:[%s3] sm:$0x1]
        %v463 = vlaneseq
        %v464 = vshrl.u32 %v463, 7
        %v465 = vsub.s32 0, %v464
        %v466 = vrot.slane %v461, %v465
        %v484 = vunpack.c.l.b16 %v445
        %v485 = vunpack.c.l.b16 %v446
        %v486 = vunpack.c.l.b16 %v447
        %v487 = vunpack.c.l.b16 %v448
        %v488 = vunpack.c.l.b16 %v449
        %v489 = vunpack.c.l.b16 %v450
        %v490 = vunpack.c.l.b16 %v451
        %v491 = vunpack.c.l.b16 %v452
        %v492 = vunpack.c.l.b16 %v453
        %v493 = vunpack.c.l.b16 %v454
        %v494 = vunpack.c.l.b16 %v455
        %v495 = vunpack.c.l.b16 %v456
        %v496 = vunpack.c.l.b16 %v457
        %v497 = vunpack.c.l.b16 %v458
        %v498 = vunpack.c.l.b16 %v459
        %v499 = vunpack.c.l.b16 %v460
        %v500 = vpack.c.b16 %v485, %v484
        %v501 = vpack.c.b16 %v487, %v486
        %v502 = vpack.c.b16 %v489, %v488
        %v503 = vpack.c.b16 %v491, %v490
        %v504 = vpack.c.b16 %v493, %v492
        %v505 = vpack.c.b16 %v495, %v494
        %v506 = vpack.c.b16 %v497, %v496
        %v507 = vpack.c.b16 %v499, %v498
        %516 = vmatprep.subr.bf16.mxu0 0
        %517 = vmatpush1.bf16.msra.mxu0 %v507
        %518 = vmatprep.subr.bf16.mxu0 0
        %519 = vmatpush1.bf16.msra.mxu0 %v506
        %520 = vmatprep.subr.bf16.mxu0 0
        %521 = vmatpush1.bf16.msra.mxu0 %v505
        %522 = vmatprep.subr.bf16.mxu0 0
        %523 = vmatpush1.bf16.msra.mxu0 %v504
        %524 = vmatprep.subr.bf16.mxu0 0
        %525 = vmatpush1.bf16.msra.mxu0 %v503
        %526 = vmatprep.subr.bf16.mxu0 0
        %527 = vmatpush1.bf16.msra.mxu0 %v502
        %528 = vmatprep.subr.bf16.mxu0 0
        %529 = vmatpush1.bf16.msra.mxu0 %v501
        %530 = vmatprep.subr.bf16.mxu0 0
        %531 = vmatpush1.bf16.msra.mxu0 %v500
        %532 = vmatprep.subr.bf16.mxu0 0
        %533 = vmatpush2.bf16.msra.mxu0 0
        %534 = vmatprep.subr.bf16.mxu0 0
        %535 = vmatpush2.bf16.msra.mxu0 0
        %536 = vmatprep.subr.bf16.mxu0 0
        %537 = vmatpush2.bf16.msra.mxu0 0
        %538 = vmatprep.subr.bf16.mxu0 0
        %539 = vmatpush2.bf16.msra.mxu0 0
        %540 = vmatprep.subr.bf16.mxu0 0
        %541 = vmatpush2.bf16.msra.mxu0 0
        %542 = vmatprep.subr.bf16.mxu0 0
        %543 = vmatpush2.bf16.msra.mxu0 0
        %544 = vmatprep.subr.bf16.mxu0 0
        %545 = vmatpush2.bf16.msra.mxu0 0
        %546 = vmatprep.subr.bf16.mxu0 0
        %547 = vmatpush2.bf16.msra.mxu0 0
        %548 = vmatprep.mubr.bf16.mxu0 0
        %549 = vmatmul.mubr.bf16.gmra.mxu0 %v444
        %v550 = vpop.f32.mrf.mxu0
        %v551 = vadd.f32 %v466, %v550
        %v552 = vpop.f32.mrf.mxu0
        %v553 = vpop.f32.mrf.mxu0
        %v554 = vpop.f32.mrf.mxu0
        %555 = vdwg.mxu0
        %v556 = vtanh.pop %v551
        %v557 = vld [vmem:[%s387] sm:$0xf]
        %v558 = vld [vmem:[#allocation8] sm:$0xf]
        %v559 = vld [vmem:[#allocation8 + $0x4] sm:$0xf]
        %v560 = vld [vmem:[#allocation8 + $0x8] sm:$0xf]
        %v561 = vld [vmem:[#allocation8 + $0xc] sm:$0xf]
        %v562 = vld [vmem:[#allocation8 + $0x10] sm:$0xf]
        %v563 = vld [vmem:[#allocation8 + $0x14] sm:$0xf]
        %v564 = vld [vmem:[#allocation8 + $0x18] sm:$0xf]
        %v565 = vld [vmem:[#allocation8 + $0x1c] sm:$0xf]
        %v566 = vld [vmem:[#allocation8 + $0x20] sm:$0xf]
        %v567 = vld [vmem:[#allocation8 + $0x24] sm:$0xf]
        %v568 = vld [vmem:[#allocation8 + $0x28] sm:$0xf]
        %v569 = vld [vmem:[#allocation8 + $0x2c] sm:$0xf]
        %v570 = vld [vmem:[#allocation8 + $0x30] sm:$0xf]
        %v571 = vld [vmem:[#allocation8 + $0x34] sm:$0xf]
        %v572 = vld [vmem:[#allocation8 + $0x38] sm:$0xf]
        %v573 = vld [vmem:[#allocation8 + $0x3c] sm:$0xf]
        %v574 = vld [vmem:[%s5] sm:$0x1]
        %v576 = vlaneseq
        %v577 = vshrl.u32 %v576, 7
        %v578 = vsub.s32 0, %v577
        %v579 = vrot.slane %v574, %v578
        %v597 = vunpack.c.l.b16 %v558
        %v598 = vunpack.c.l.b16 %v559
        %v599 = vunpack.c.l.b16 %v560
        %v600 = vunpack.c.l.b16 %v561
        %v601 = vunpack.c.l.b16 %v562
        %v602 = vunpack.c.l.b16 %v563
        %v603 = vunpack.c.l.b16 %v564
        %v604 = vunpack.c.l.b16 %v565
        %v605 = vunpack.c.l.b16 %v566
        %v606 = vunpack.c.l.b16 %v567
        %v607 = vunpack.c.l.b16 %v568
        %v608 = vunpack.c.l.b16 %v569
        %v609 = vunpack.c.l.b16 %v570
        %v610 = vunpack.c.l.b16 %v571
        %v611 = vunpack.c.l.b16 %v572
        %v612 = vunpack.c.l.b16 %v573
        %v613 = vpack.c.b16 %v598, %v597
        %v614 = vpack.c.b16 %v600, %v599
        %v615 = vpack.c.b16 %v602, %v601
        %v616 = vpack.c.b16 %v604, %v603
        %v617 = vpack.c.b16 %v606, %v605
        %v618 = vpack.c.b16 %v608, %v607
        %v619 = vpack.c.b16 %v610, %v609
        %v620 = vpack.c.b16 %v612, %v611
        %629 = vmatprep.subr.bf16.mxu0 0
        %630 = vmatpush1.bf16.msra.mxu0 %v620
        %631 = vmatprep.subr.bf16.mxu0 0
        %632 = vmatpush1.bf16.msra.mxu0 %v619
        %633 = vmatprep.subr.bf16.mxu0 0
        %634 = vmatpush1.bf16.msra.mxu0 %v618
        %635 = vmatprep.subr.bf16.mxu0 0
        %636 = vmatpush1.bf16.msra.mxu0 %v617
        %637 = vmatprep.subr.bf16.mxu0 0
        %638 = vmatpush1.bf16.msra.mxu0 %v616
        %639 = vmatprep.subr.bf16.mxu0 0
        %640 = vmatpush1.bf16.msra.mxu0 %v615
        %641 = vmatprep.subr.bf16.mxu0 0
        %642 = vmatpush1.bf16.msra.mxu0 %v614
        %643 = vmatprep.subr.bf16.mxu0 0
        %644 = vmatpush1.bf16.msra.mxu0 %v613
        %645 = vmatprep.subr.bf16.mxu0 0
        %646 = vmatpush2.bf16.msra.mxu0 0
        %647 = vmatprep.subr.bf16.mxu0 0
        %648 = vmatpush2.bf16.msra.mxu0 0
        %649 = vmatprep.subr.bf16.mxu0 0
        %650 = vmatpush2.bf16.msra.mxu0 0
        %651 = vmatprep.subr.bf16.mxu0 0
        %652 = vmatpush2.bf16.msra.mxu0 0
        %653 = vmatprep.subr.bf16.mxu0 0
        %654 = vmatpush2.bf16.msra.mxu0 0
        %655 = vmatprep.subr.bf16.mxu0 0
        %656 = vmatpush2.bf16.msra.mxu0 0
        %657 = vmatprep.subr.bf16.mxu0 0
        %658 = vmatpush2.bf16.msra.mxu0 0
        %659 = vmatprep.subr.bf16.mxu0 0
        %660 = vmatpush2.bf16.msra.mxu0 0
        %661 = vmatprep.mubr.bf16.mxu0 0
        %662 = vmatmul.mubr.bf16.gmra.mxu0 %v557
        %v663 = vpop.f32.mrf.mxu0
        %v664 = vadd.f32 %v579, %v663
        %v665 = vpop.f32.mrf.mxu0
        %v666 = vpop.f32.mrf.mxu0
        %v667 = vpop.f32.mrf.mxu0
        %668 = vdwg.mxu0
        %v669 = vtanh.pop %v664
        %v670 = vpack.c.bf16 %v556, %v556
        %v671 = vpack.c.bf16 %v669, %v669
        %672 = vmatprep.subr.bf16.mxu0 0
        %673 = vmatpush1.bf16.xpose.msra.mxu0 0
        %674 = vmatprep.subr.bf16.mxu0 0
        %675 = vmatpush1.bf16.xpose.msra.mxu0 0
        %676 = vmatprep.subr.bf16.mxu0 0
        %677 = vmatpush1.bf16.xpose.msra.mxu0 0
        %678 = vmatprep.subr.bf16.mxu0 0
        %679 = vmatpush1.bf16.xpose.msra.mxu0 0
        %680 = vmatprep.subr.bf16.mxu0 0
        %681 = vmatpush1.bf16.xpose.msra.mxu0 0
        %682 = vmatprep.subr.bf16.mxu0 0
        %683 = vmatpush1.bf16.xpose.msra.mxu0 0
        %684 = vmatprep.subr.bf16.mxu0 0
        %685 = vmatpush1.bf16.xpose.msra.mxu0 0
        %686 = vmatprep.subr.bf16.mxu0 0
        %687 = vmatpush1.bf16.xpose.msra.mxu0 %v670
        %688 = vmatprep.subr.bf16.mxu0 0
        %689 = vmatpush2.bf16.xpose.msra.mxu0 0
        %690 = vmatprep.subr.bf16.mxu0 0
        %691 = vmatpush2.bf16.xpose.msra.mxu0 0
        %692 = vmatprep.subr.bf16.mxu0 0
        %693 = vmatpush2.bf16.xpose.msra.mxu0 0
        %694 = vmatprep.subr.bf16.mxu0 0
        %695 = vmatpush2.bf16.xpose.msra.mxu0 0
        %696 = vmatprep.subr.bf16.mxu0 0
        %697 = vmatpush2.bf16.xpose.msra.mxu0 0
        %698 = vmatprep.subr.bf16.mxu0 0
        %699 = vmatpush2.bf16.xpose.msra.mxu0 0
        %700 = vmatprep.subr.bf16.mxu0 0
        %701 = vmatpush2.bf16.xpose.msra.mxu0 0
        %702 = vmatprep.subr.bf16.mxu0 0
        %703 = vmatpush2.bf16.xpose.msra.mxu0 0
        %704 = vmatprep.mubr.bf16.mxu0 0
        %705 = vmatmul.mubr.bf16.gmra.mxu0 %v671
        %v706 = vpop.f32.mrf.mxu0
        %v707 = vadd.f32 0.0, %v706
        %v708 = vpop.f32.mrf.mxu0
        %v709 = vpop.f32.mrf.mxu0
        %v710 = vpop.f32.mrf.mxu0
        %711 = vdwg.mxu0
        %v712 = vmul.f32 %v707, 0.17677669
        %vm713 = vcmask 64512
        %v714 = vsel %vm713, %v712, -inf
        %715 = vmax.xlane.f32.xlu0 %v714
        %v716 = vpop.xlane.xlu0 %715
        %v717 = vsub.f32 %v712, %v716
        %v718 = vmul.f32 %v717, 1.442695
        %v719 = vpow.pop %v718
        %v720 = vsel %vm713, %v719, 0.0
        %721 = vadd.xlane.f32.xlu0 %v720
        %v722 = vpop.xlane.xlu0 %721
        %v723 = vrcp.pop %v722
        %v724 = vmul.f32 %v719, %v723
        %v725 = vpack.c.bf16 %v724, %v724
        %v727 = vsel %vm713, %v725, 0
        %vm729 = vcmask 1043456
        %v731 = vsel %vm729, %v670, 0
        %733 = vmatprep.subr.bf16.mxu0 0
        %734 = vmatpush1.bf16.msra.mxu0 0
        %735 = vmatprep.subr.bf16.mxu0 0
        %736 = vmatpush1.bf16.msra.mxu0 0
        %737 = vmatprep.subr.bf16.mxu0 0
        %738 = vmatpush1.bf16.msra.mxu0 0
        %739 = vmatprep.subr.bf16.mxu0 0
        %740 = vmatpush1.bf16.msra.mxu0 0
        %741 = vmatprep.subr.bf16.mxu0 0
        %742 = vmatpush1.bf16.msra.mxu0 0
        %743 = vmatprep.subr.bf16.mxu0 0
        %744 = vmatpush1.bf16.msra.mxu0 0
        %745 = vmatprep.subr.bf16.mxu0 0
        %746 = vmatpush1.bf16.msra.mxu0 0
        %747 = vmatprep.subr.bf16.mxu0 0
        %748 = vmatpush1.bf16.msra.mxu0 %v731
        %749 = vmatprep.subr.bf16.mxu0 0
        %750 = vmatpush2.bf16.msra.mxu0 0
        %751 = vmatprep.subr.bf16.mxu0 0
        %752 = vmatpush2.bf16.msra.mxu0 0
        %753 = vmatprep.subr.bf16.mxu0 0
        %754 = vmatpush2.bf16.msra.mxu0 0
        %755 = vmatprep.subr.bf16.mxu0 0
        %756 = vmatpush2.bf16.msra.mxu0 0
        %757 = vmatprep.subr.bf16.mxu0 0
        %758 = vmatpush2.bf16.msra.mxu0 0
        %759 = vmatprep.subr.bf16.mxu0 0
        %760 = vmatpush2.bf16.msra.mxu0 0
        %761 = vmatprep.subr.bf16.mxu0 0
        %762 = vmatpush2.bf16.msra.mxu0 0
        %763 = vmatprep.subr.bf16.mxu0 0
        %764 = vmatpush2.bf16.msra.mxu0 0
        %765 = vmatprep.mubr.bf16.mxu0 0
        %766 = vmatmul.mubr.bf16.gmra.mxu0 %v727
        %v767 = vpop.f32.mrf.mxu0
        %v768 = vadd.f32 0.0, %v767
        %v769 = vpop.f32.mrf.mxu0
        %v770 = vpop.f32.mrf.mxu0
        %v771 = vpop.f32.mrf.mxu0
        %772 = vdwg.mxu0
        %v773 = vpack.c.bf16 %v768, %v768
        %v774 = vld [vmem:[#allocation10] sm:$0xf]
        %v775 = vld [vmem:[#allocation10 + $0x4] sm:$0xf]
        %v776 = vld [vmem:[#allocation10 + $0x8] sm:$0xf]
        %v777 = vld [vmem:[#allocation10 + $0xc] sm:$0xf]
        %v778 = vld [vmem:[#allocation10 + $0x10] sm:$0xf]
        %v779 = vld [vmem:[#allocation10 + $0x14] sm:$0xf]
        %v780 = vld [vmem:[#allocation10 + $0x18] sm:$0xf]
        %v781 = vld [vmem:[#allocation10 + $0x1c] sm:$0xf]
        %v782 = vld [vmem:[#allocation10 + $0x20] sm:$0xf]
        %v783 = vld [vmem:[#allocation10 + $0x24] sm:$0xf]
        %v784 = vld [vmem:[#allocation10 + $0x28] sm:$0xf]
        %v785 = vld [vmem:[#allocation10 + $0x2c] sm:$0xf]
        %v786 = vld [vmem:[#allocation10 + $0x30] sm:$0xf]
        %v787 = vld [vmem:[#allocation10 + $0x34] sm:$0xf]
        %v788 = vld [vmem:[#allocation10 + $0x38] sm:$0xf]
        %v789 = vld [vmem:[#allocation10 + $0x3c] sm:$0xf]
        %v790 = vld [vmem:[#allocation11] sm:$0xf]
        %v791 = vld [vmem:[#allocation11 + $0x4] sm:$0xf]
        %v792 = vld [vmem:[#allocation11 + $0x8] sm:$0xf]
        %v793 = vld [vmem:[#allocation11 + $0xc] sm:$0xf]
        %v794 = vld [vmem:[#allocation11 + $0x10] sm:$0xf]
        %v795 = vld [vmem:[#allocation11 + $0x14] sm:$0xf]
        %v796 = vld [vmem:[#allocation11 + $0x18] sm:$0xf]
        %v797 = vld [vmem:[#allocation11 + $0x1c] sm:$0xf]
        %v798 = vld [vmem:[#allocation11 + $0x20] sm:$0xf]
        %v799 = vld [vmem:[#allocation11 + $0x24] sm:$0xf]
        %v800 = vld [vmem:[#allocation11 + $0x28] sm:$0xf]
        %v801 = vld [vmem:[#allocation11 + $0x2c] sm:$0xf]
        %v802 = vld [vmem:[#allocation11 + $0x30] sm:$0xf]
        %v803 = vld [vmem:[#allocation11 + $0x34] sm:$0xf]
        %v804 = vld [vmem:[#allocation11 + $0x38] sm:$0xf]
        %v805 = vld [vmem:[#allocation11 + $0x3c] sm:$0xf]
        %v822 = vunpack.c.l.b16 %v790
        %v823 = vunpack.c.l.b16 %v791
        %v824 = vunpack.c.l.b16 %v792
        %v825 = vunpack.c.l.b16 %v793
        %v826 = vunpack.c.l.b16 %v794
        %v827 = vunpack.c.l.b16 %v795
        %v828 = vunpack.c.l.b16 %v796
        %v829 = vunpack.c.l.b16 %v797
        %v830 = vunpack.c.l.b16 %v798
        %v831 = vunpack.c.l.b16 %v799
        %v832 = vunpack.c.l.b16 %v800
        %v833 = vunpack.c.l.b16 %v801
        %v834 = vunpack.c.l.b16 %v802
        %v835 = vunpack.c.l.b16 %v803
        %v836 = vunpack.c.l.b16 %v804
        %v837 = vunpack.c.l.b16 %v805
        %v838 = vpack.c.b16 %v823, %v822
        %v839 = vpack.c.b16 %v825, %v824
        %v840 = vpack.c.b16 %v827, %v826
        %v841 = vpack.c.b16 %v829, %v828
        %v842 = vpack.c.b16 %v831, %v830
        %v843 = vpack.c.b16 %v833, %v832
        %v844 = vpack.c.b16 %v835, %v834
        %v845 = vpack.c.b16 %v837, %v836
        %854 = vmatprep.subr.bf16.mxu0 0
        %855 = vmatpush1.bf16.msra.mxu0 %v845
        %856 = vmatprep.subr.bf16.mxu0 0
        %857 = vmatpush1.bf16.msra.mxu0 %v844
        %858 = vmatprep.subr.bf16.mxu0 0
        %859 = vmatpush1.bf16.msra.mxu0 %v843
        %860 = vmatprep.subr.bf16.mxu0 0
        %861 = vmatpush1.bf16.msra.mxu0 %v842
        %862 = vmatprep.subr.bf16.mxu0 0
        %863 = vmatpush1.bf16.msra.mxu0 %v841
        %864 = vmatprep.subr.bf16.mxu0 0
        %865 = vmatpush1.bf16.msra.mxu0 %v840
        %866 = vmatprep.subr.bf16.mxu0 0
        %867 = vmatpush1.bf16.msra.mxu0 %v839
        %868 = vmatprep.subr.bf16.mxu0 0
        %869 = vmatpush1.bf16.msra.mxu0 %v838
        %870 = vmatprep.subr.bf16.mxu0 0
        %871 = vmatpush2.bf16.msra.mxu0 0
        %872 = vmatprep.subr.bf16.mxu0 0
        %873 = vmatpush2.bf16.msra.mxu0 0
        %874 = vmatprep.subr.bf16.mxu0 0
        %875 = vmatpush2.bf16.msra.mxu0 0
        %876 = vmatprep.subr.bf16.mxu0 0
        %877 = vmatpush2.bf16.msra.mxu0 0
        %878 = vmatprep.subr.bf16.mxu0 0
        %879 = vmatpush2.bf16.msra.mxu0 0
        %880 = vmatprep.subr.bf16.mxu0 0
        %881 = vmatpush2.bf16.msra.mxu0 0
        %882 = vmatprep.subr.bf16.mxu0 0
        %883 = vmatpush2.bf16.msra.mxu0 0
        %884 = vmatprep.subr.bf16.mxu0 0
        %885 = vmatpush2.bf16.msra.mxu0 0
        %886 = vmatprep.mubr.bf16.mxu0 0
        %887 = vmatmul.mubr.bf16.gmra.mxu0 %v773
        %v888 = vpop.f32.mrf.mxu0
        %v889 = vadd.f32 0.0, %v888
        %v890 = vpop.f32.mrf.mxu0
        %v891 = vpop.f32.mrf.mxu0
        %v892 = vpop.f32.mrf.mxu0
        %893 = vdwg.mxu0
        %v910 = vunpack.c.l.b16 %v774
        %v911 = vunpack.c.l.b16 %v775
        %v912 = vunpack.c.l.b16 %v776
        %v913 = vunpack.c.l.b16 %v777
        %v914 = vunpack.c.l.b16 %v778
        %v915 = vunpack.c.l.b16 %v779
        %v916 = vunpack.c.l.b16 %v780
        %v917 = vunpack.c.l.b16 %v781
        %v918 = vunpack.c.l.b16 %v782
        %v919 = vunpack.c.l.b16 %v783
        %v920 = vunpack.c.l.b16 %v784
        %v921 = vunpack.c.l.b16 %v785
        %v922 = vunpack.c.l.b16 %v786
        %v923 = vunpack.c.l.b16 %v787
        %v924 = vunpack.c.l.b16 %v788
        %v925 = vunpack.c.l.b16 %v789
        %v926 = vpack.c.b16 %v911, %v910
        %v927 = vpack.c.b16 %v913, %v912
        %v928 = vpack.c.b16 %v915, %v914
        %v929 = vpack.c.b16 %v917, %v916
        %v930 = vpack.c.b16 %v919, %v918
        %v931 = vpack.c.b16 %v921, %v920
        %v932 = vpack.c.b16 %v923, %v922
        %v933 = vpack.c.b16 %v925, %v924
        %942 = vmatprep.subr.bf16.mxu0 0
        %943 = vmatpush1.bf16.msra.mxu0 %v933
        %944 = vmatprep.subr.bf16.mxu0 0
        %945 = vmatpush1.bf16.msra.mxu0 %v932
        %946 = vmatprep.subr.bf16.mxu0 0
        %947 = vmatpush1.bf16.msra.mxu0 %v931
        %948 = vmatprep.subr.bf16.mxu0 0
        %949 = vmatpush1.bf16.msra.mxu0 %v930
        %950 = vmatprep.subr.bf16.mxu0 0
        %951 = vmatpush1.bf16.msra.mxu0 %v929
        %952 = vmatprep.subr.bf16.mxu0 0
        %953 = vmatpush1.bf16.msra.mxu0 %v928
        %954 = vmatprep.subr.bf16.mxu0 0
        %955 = vmatpush1.bf16.msra.mxu0 %v927
        %956 = vmatprep.subr.bf16.mxu0 0
        %957 = vmatpush1.bf16.msra.mxu0 %v926
        %958 = vmatprep.subr.bf16.mxu0 0
        %959 = vmatpush2.bf16.msra.mxu0 0
        %960 = vmatprep.subr.bf16.mxu0 0
        %961 = vmatpush2.bf16.msra.mxu0 0
        %962 = vmatprep.subr.bf16.mxu0 0
        %963 = vmatpush2.bf16.msra.mxu0 0
        %964 = vmatprep.subr.bf16.mxu0 0
        %965 = vmatpush2.bf16.msra.mxu0 0
        %966 = vmatprep.subr.bf16.mxu0 0
        %967 = vmatpush2.bf16.msra.mxu0 0
        %968 = vmatprep.subr.bf16.mxu0 0
        %969 = vmatpush2.bf16.msra.mxu0 0
        %970 = vmatprep.subr.bf16.mxu0 0
        %971 = vmatpush2.bf16.msra.mxu0 0
        %972 = vmatprep.subr.bf16.mxu0 0
        %973 = vmatpush2.bf16.msra.mxu0 0
        %974 = vmatprep.mubr.bf16.mxu0 0
        %975 = vmatmul.mubr.bf16.gmra.mxu0 %v671
        %v976 = vpop.f32.mrf.mxu0
        %v977 = vadd.f32 %v889, %v976
        %v978 = vpop.f32.mrf.mxu0
        %v979 = vpop.f32.mrf.mxu0
        %v980 = vpop.f32.mrf.mxu0
        %981 = vdwg.mxu0
        %v982 = vld [vmem:[%s8] sm:$0x1]
        %v984 = vlaneseq
        %v985 = vshrl.u32 %v984, 7
        %v986 = vsub.s32 0, %v985
        %v987 = vrot.slane %v982, %v986
        %v989 = vadd.f32 %v977, %v987
        %990 = vst [vmem:[%s442] sm:$0xff] %v989
        %s991 = sand.u32 %s238, 1
        %s992 = scalar_lea.sflag [#allocation4], %s991
        %s993 = sand.u32 %s238, 1
        %s994 = smul.addr %s993, 8
        %s995 = scalar_lea.vmem [#allocation13], %s994
        // Predicated region
        $region81: #{tpu_custom_call.1} parent=55 // pred_check
          %p996 = pneg %p248
        $region82: #{tpu_custom_call.1} parent=55 // pred_check_branch
          %998 = sbr.rel (%p996) target = $region84
        $region83: #{tpu_custom_call.1} parent=55 // pred_region
          %s1000 = ssub.s32 128, 128
          %1001 = vsyncadd %s992, %s1000
          %s1002 = smul.addr %s31, 128
          %s1003 = scalar_lea.hbm %s9, %s1002
          %s1005 = sshll.u32 %s995, 4
          %s1006 = int_to_ptr.vmem [resolvable:$true] %s1005
          %1008 = dma.vmem_to_hbm [thread:$0]  %s1006, 128, %s1003, %s992
        $region84: #{tpu_custom_call.1} parent=55 // pred_fallthru
          _
      $region56: #{tpu_custom_call.1} parent=5 // pred_fallthru
        _
      %p1009 = scmp.le.s32.totalorder 2, %s26
      // Predicated region
      $region85: #{tpu_custom_call.1} parent=5 // pred_check
        %p1010 = pneg %p1009
      $region86: #{tpu_custom_call.1} parent=5 // pred_check_branch
        %1012 = sbr.rel (%p1010) target = $region88
      $region87: #{tpu_custom_call.1} parent=5 // pred_region
        %s1013 = ssub.s32 %s26, 2
        // Predicated region
        $region89: #{tpu_custom_call.1} parent=87 // pred_check
          %p1014 = pneg %p254
        $region90: #{tpu_custom_call.1} parent=87 // pred_check_branch
          %1016 = sbr.rel (%p1014) target = $region92
        $region91: #{tpu_custom_call.1} parent=87 // pred_region
          %s1017 = sand.u32 %s239, 1
          %s1018 = scalar_lea.sflag [#allocation4], %s1017
          %s1019 = sand.u32 %s239, 1
          %s1020 = smul.addr %s1019, 8
          %s1021 = scalar_lea.vmem [#allocation13], %s1020
          %1022 = dma.done %s1018, 128
        $region92: #{tpu_custom_call.1} parent=87 // pred_fallthru
          _
      $region88: #{tpu_custom_call.1} parent=5 // pred_fallthru
        _
    $region6: #{tpu_custom_call.1} parent=1 // loop_footer
      %s30 = sadd.s32 1, %s26
    $region7: #{tpu_custom_call.1} parent=1 // loop_footer_branch
      %25 = sbr.rel target = $region3
    $region8: #{tpu_custom_call.1} parent=1 // loop_exit
      _
    %1023 = vsyncpa [#allocation3], 1
    %s1024 = scalar_lea.sflag [#allocation3], 1
    %1025 = vsyncpa %s1024, 1
    %1026 = vsyncpa [#allocation6], 1
    %s1027 = scalar_lea.sflag [#allocation6], 1
    %1028 = vsyncpa %s1027, 1
    %1029 = vsyncpa [#allocation9], 1
    %1030 = vsyncpa [#allocation12], 1
    %1031 = vsyncpa [#allocation4], 1
    %s1032 = scalar_lea.sflag [#allocation4], 1
    %1033 = vsyncpa %s1032, 1

</llo_original>
